<compile_context>
chip_gen: v7x
topology: tpu7x:2x2x1
jax: 0.10.0
libtpu: 0.0.40
codegen_flags: <defaults>
</compile_context>

<pallas_src>
import jax
import jax.numpy as jnp
from jax import lax
from jax.experimental import pallas as pl
from jax.experimental.pallas import tpu as pltpu


# Contract the last dim of both operands ("NT" matmul): (64,5) x (T,5) -> (64,T).
NT_DIMS = (((1,), (1,)), ((), ()))


def mlp_kernel(x_ref, w1t_ref, b1_ref, w2t_ref, b2_ref, w3c_ref, b3_ref, o_ref):
    """Fused 5->64->32->1 MLP on one batch tile.

    x_ref   : (TILE_B, 5)  natural row-major input tile (batch on sublanes)
    w1t_ref : (64, 5)  bf16     b1_ref : (64, 1) f32
    w2t_ref : (32, 64) bf16     b2_ref : (32, 1) f32
    w3c_ref : (32, 1)  f32      b3_ref : (1,)    f32 scalar in SMEM
    o_ref   : (1, TILE_B)  lane-dense output row (batch on lanes)
    """
    xb = x_ref[...].astype(jnp.bfloat16)                        # (T, 5)
    # fc1 + ReLU: NT matmul contracts the feature axis and lands batch on the
    # lane dimension -> no wrapper transpose, feature-major from here on.
    h1 = lax.dot_general(w1t_ref[...], xb, NT_DIMS,
                         preferred_element_type=jnp.float32)    # (64, T) f32
    h1 = jnp.maximum(h1 + b1_ref[...], 0.0)
    # fc2 + ReLU: bf16 operands, f32 accumulate.
    h2 = jnp.dot(w2t_ref[...], h1.astype(jnp.bfloat16),
                 preferred_element_type=jnp.float32)            # (32, T) f32
    h2 = jnp.maximum(h2 + b2_ref[...], 0.0)
    # fc3 (out_features == 1): VPU multiply + sublane (XLU) reduce; keeps the
    # MXU out of a 1-column matmul.
    o = jnp.sum(h2 * w3c_ref[...], axis=0, keepdims=True) + b3_ref[0]
    o_ref[...] = o.astype(o_ref.dtype)


def _pick_tile_b(batch, requested):
    """Lane-aligned batch tile; >= 2 tiles when possible so v7x's two
    TensorCores both get work on the 'parallel' batch axis."""
    t = max(128, (int(requested) // 128) * 128)
    half = ((pl.cdiv(batch, 2) + 127) // 128) * 128   # round_up(cdiv(B,2), 128)
    return min(t, max(128, half))


def make_stability_predictor(w1, b1, w2, b2, w3, b3, *, tile_b=8192):
    """Returns a jitted forward pass matching PyTorch StabilityPredictor.

    Weight prep happens once here (hoisted out of the per-call hot path and
    folded as jit-time constants).
    """
    assert w1.shape == (5, 64) and w2.shape == (64, 32) and w3.shape == (32, 1)
    w1t = jnp.asarray(w1.T, jnp.bfloat16)              # (64, 5)
    w2t = jnp.asarray(w2.T, jnp.bfloat16)              # (32, 64)
    b1c = jnp.asarray(b1, jnp.float32).reshape(64, 1)
    b2c = jnp.asarray(b2, jnp.float32).reshape(32, 1)
    w3c = jnp.asarray(w3, jnp.float32).reshape(32, 1)
    b3s = jnp.asarray(b3, jnp.float32).reshape(1)

    @jax.jit
    def apply(x):
        batch, feat = x.shape
        assert feat == 5
        tb = _pick_tile_b(batch, tile_b)
        n_tiles = pl.cdiv(batch, tb)
        bp = n_tiles * tb

        flops = 2 * batch * (5 * 64 + 64 * 32 + 32)
        weight_bytes = sum(int(a.size) * a.dtype.itemsize
                           for a in (w1t, b1c, w2t, b2c, w3c, b3s))
        bytes_accessed = batch * 5 * x.dtype.itemsize + batch * 4 + weight_bytes

        out_row = pl.pallas_call(
            mlp_kernel,
            out_shape=jax.ShapeDtypeStruct((1, bp), jnp.float32),
            grid=(n_tiles,),
            in_specs=[
                # x tile streams per grid step (double-buffered DMA overlaps compute).
                pl.BlockSpec((tb, 5), lambda i: (i, 0)),
                # Weights/biases: constant index_map -> fetched once, VMEM-resident.
                pl.BlockSpec((64, 5), lambda i: (0, 0)),
                pl.BlockSpec((64, 1), lambda i: (0, 0)),
                pl.BlockSpec((32, 64), lambda i: (0, 0)),
                pl.BlockSpec((32, 1), lambda i: (0, 0)),
                pl.BlockSpec((32, 1), lambda i: (0, 0)),
                # Scalar fc3 bias in SMEM (no padded VMEM tile / extra DMA stream).
                pl.BlockSpec(memory_space=pltpu.SMEM),
            ],
            out_specs=pl.BlockSpec((1, tb), lambda i: (0, i)),
            compiler_params=pltpu.CompilerParams(
                dimension_semantics=("parallel",),      # shard batch tiles across TCs
                vmem_limit_bytes=32 * 1024 * 1024,      # covers v5e's 16 MiB default
            ),
            cost_estimate=pl.CostEstimate(
                flops=flops, transcendentals=0, bytes_accessed=bytes_accessed),
        )(x, w1t, b1c, w2t, b2c, w3c, b3s)

        # (1, Bp) lane-dense row -> (B, 1) column, dropping grid-padding lanes.
        return out_row[0, :batch].reshape(batch, 1)

    return apply


def init_params(key):
    # Deterministic init mirroring PyTorch nn.Linear default:
    # U(-1/sqrt(fan_in), 1/sqrt(fan_in)) for both weight and bias.
    def linear(key, fan_in, fan_out):
        kw, kb = jax.random.split(key)
        bound = 1.0 / (fan_in ** 0.5)
        w = jax.random.uniform(kw, (fan_in, fan_out), jnp.float32, -bound, bound)
        b = jax.random.uniform(kb, (fan_out,), jnp.float32, -bound, bound)
        return w, b

    k1, k2, k3 = jax.random.split(key, 3)
    w1, b1 = linear(k1, 5, 64)
    w2, b2 = linear(k2, 64, 32)
    w3, b3 = linear(k3, 32, 1)
    return w1, b1, w2, b2, w3, b3


def reference(x, w1, b1, w2, b2, w3, b3):
    h = jax.nn.relu(x @ w1 + b1)
    h = jax.nn.relu(h @ w2 + b2)
    return h @ w3 + b3


if __name__ == "__main__":
    key = jax.random.PRNGKey(0)
    kparams, kx1, kx2 = jax.random.split(key, 3)
    params = init_params(kparams)
    predict = make_stability_predictor(*params)

    # Tolerance note: matmuls use bf16 operands with f32 accumulation (native
    # MXU path), so results match an f32 reference to ~1e-3, not 1e-5.
    TOL = dict(atol=2e-2, rtol=2e-2)

    # Small batch: single 128-lane tile, exercises the ragged (B < tile) path.
    x_small = jax.random.normal(kx1, (8, 5), jnp.float32)
    out_small = jax.block_until_ready(predict(x_small))
    ref_small = reference(x_small, *params)
    assert out_small.shape == (8, 1), out_small.shape
    err_s = float(jnp.max(jnp.abs(out_small - ref_small)))
    assert jnp.allclose(out_small, ref_small, **TOL), f"mismatch small batch, max err {err_s}"

    # Ragged multi-tile batch: tile picker gives 2 tiles (last one partial).
    x_big = jax.random.normal(kx2, (300, 5), jnp.float32)
    out_big = jax.block_until_ready(predict(x_big))
    ref_big = reference(x_big, *params)
    assert out_big.shape == (300, 1), out_big.shape
    err_b = float(jnp.max(jnp.abs(out_big - ref_big)))
    assert jnp.allclose(out_big, ref_big, **TOL), f"mismatch multi-tile batch, max err {err_b}"

    print("KERNEL_OK")
</pallas_src>

<mosaic_0001>
module attributes {stable_mosaic.version = 11 : i64} {
  func.func @mlp_kernel(%arg0: i32, %arg1: memref<128x5xf32, #tpu.memory_space<vmem>>, %arg2: memref<64x5xbf16, #tpu.memory_space<vmem>>, %arg3: memref<64x1xf32, #tpu.memory_space<vmem>>, %arg4: memref<32x64xbf16, #tpu.memory_space<vmem>>, %arg5: memref<32x1xf32, #tpu.memory_space<vmem>>, %arg6: memref<32x1xf32, #tpu.memory_space<vmem>>, %arg7: memref<1xf32, #tpu.memory_space<smem>>, %arg8: memref<1x128xf32, #tpu.memory_space<vmem>>) attributes {dimension_semantics = [#tpu.dimension_semantics<parallel>], iteration_bounds = array<i64: 1>, scalar_prefetch = 0 : i64, scratch_operands = 0 : i64, tpu.core_type = #tpu.core_type<tc>, window_params = [{transform_indices = @transform_0, window_bounds = array<i64: 128, 5>}, {pipeline_mode = #tpu.pipeline_mode<synchronous>, transform_indices = @transform_1, window_bounds = array<i64: 64, 5>}, {pipeline_mode = #tpu.pipeline_mode<synchronous>, transform_indices = @transform_2, window_bounds = array<i64: 64, 1>}, {pipeline_mode = #tpu.pipeline_mode<synchronous>, transform_indices = @transform_3, window_bounds = array<i64: 32, 64>}, {pipeline_mode = #tpu.pipeline_mode<synchronous>, transform_indices = @transform_4, window_bounds = array<i64: 32, 1>}, {pipeline_mode = #tpu.pipeline_mode<synchronous>, transform_indices = @transform_5, window_bounds = array<i64: 32, 1>}, {transform_indices = @transform_6, window_bounds = array<i64: 1>}, {transform_indices = @transform_7, window_bounds = array<i64: 1, 128>}]} {
    %c0 = arith.constant 0 : index
    %c0_0 = arith.constant 0 : index
    %0 = vector.load %arg1[%c0, %c0_0] : memref<128x5xf32, #tpu.memory_space<vmem>>, vector<128x5xf32>
    %1 = arith.truncf %0 : vector<128x5xf32> to vector<128x5xbf16>
    %c0_1 = arith.constant 0 : index
    %c0_2 = arith.constant 0 : index
    %2 = vector.load %arg2[%c0_1, %c0_2] : memref<64x5xbf16, #tpu.memory_space<vmem>>, vector<64x5xbf16>
    %cst = arith.constant dense<0.000000e+00> : vector<64x128xf32>
    %3 = tpu.matmul %2, %1, %cst {dimension_numbers = #tpu.dot_dimension_numbers<[1], [1], [0], [0], [0, 0, 1, 0], [], []>} : vector<64x5xbf16>, vector<128x5xbf16>, vector<64x128xf32> -> vector<64x128xf32>
    %c0_3 = arith.constant 0 : index
    %c0_4 = arith.constant 0 : index
    %4 = vector.load %arg3[%c0_3, %c0_4] : memref<64x1xf32, #tpu.memory_space<vmem>>, vector<64x1xf32>
    %5 = vector.broadcast %4 : vector<64x1xf32> to vector<64x128xf32>
    %6 = arith.addf %3, %5 : vector<64x128xf32>
    %cst_5 = arith.constant 0.000000e+00 : f32
    %7 = vector.broadcast %cst_5 : f32 to vector<64x128xf32>
    %8 = arith.maximumf %6, %7 : vector<64x128xf32>
    %c0_6 = arith.constant 0 : index
    %c0_7 = arith.constant 0 : index
    %9 = vector.load %arg4[%c0_6, %c0_7] : memref<32x64xbf16, #tpu.memory_space<vmem>>, vector<32x64xbf16>
    %10 = arith.truncf %8 : vector<64x128xf32> to vector<64x128xbf16>
    %cst_8 = arith.constant dense<0.000000e+00> : vector<32x128xf32>
    %11 = tpu.matmul %9, %10, %cst_8 {dimension_numbers = #tpu.dot_dimension_numbers<[1], [0], [0], [1], [0, 0, 1, 1], [], []>} : vector<32x64xbf16>, vector<64x128xbf16>, vector<32x128xf32> -> vector<32x128xf32>
    %c0_9 = arith.constant 0 : index
    %c0_10 = arith.constant 0 : index
    %12 = vector.load %arg5[%c0_9, %c0_10] : memref<32x1xf32, #tpu.memory_space<vmem>>, vector<32x1xf32>
    %13 = vector.broadcast %12 : vector<32x1xf32> to vector<32x128xf32>
    %14 = arith.addf %11, %13 : vector<32x128xf32>
    %cst_11 = arith.constant 0.000000e+00 : f32
    %15 = vector.broadcast %cst_11 : f32 to vector<32x128xf32>
    %16 = arith.maximumf %14, %15 : vector<32x128xf32>
    %c0_12 = arith.constant 0 : index
    %c0_13 = arith.constant 0 : index
    %17 = vector.load %arg6[%c0_12, %c0_13] : memref<32x1xf32, #tpu.memory_space<vmem>>, vector<32x1xf32>
    %18 = vector.broadcast %17 : vector<32x1xf32> to vector<32x128xf32>
    %19 = arith.mulf %16, %18 : vector<32x128xf32>
    %cst_14 = arith.constant dense<0.000000e+00> : vector<128xf32>
    %20 = vector.multi_reduction <add>, %19, %cst_14 [0] : vector<32x128xf32> to vector<128xf32>
    %21 = vector.shape_cast %20 : vector<128xf32> to vector<1x128xf32>
    %c0_15 = arith.constant 0 : index
    %22 = memref.load %arg7[%c0_15] : memref<1xf32, #tpu.memory_space<smem>>
    %23 = vector.broadcast %22 : f32 to vector<1x128xf32>
    %24 = arith.addf %21, %23 : vector<1x128xf32>
    %c0_16 = arith.constant 0 : index
    %c0_17 = arith.constant 0 : index
    %25 = vector.load %arg8[%c0_16, %c0_17] : memref<1x128xf32, #tpu.memory_space<vmem>>, vector<1x128xf32>
    tpu.vector_store %arg8[%c0_16, %c0_17], %24 {strides = array<i32>} : memref<1x128xf32, #tpu.memory_space<vmem>>, vector<1x128xf32>,
    return
  }
  func.func @transform_0(%arg0: i32) -> (i32, i32) {
    %c0_i32 = arith.constant 0 : i32
    %c0_i32_0 = arith.constant 0 : i32
    return %arg0, %c0_i32 : i32, i32
  }
  func.func @transform_1(%arg0: i32) -> (i32, i32) {
    %c0_i32 = arith.constant 0 : i32
    %c0_i32_0 = arith.constant 0 : i32
    %c0_i32_1 = arith.constant 0 : i32
    return %c0_i32, %c0_i32_0 : i32, i32
  }
  func.func @transform_2(%arg0: i32) -> (i32, i32) {
    %c0_i32 = arith.constant 0 : i32
    %c0_i32_0 = arith.constant 0 : i32
    %c0_i32_1 = arith.constant 0 : i32
    return %c0_i32, %c0_i32_0 : i32, i32
  }
  func.func @transform_3(%arg0: i32) -> (i32, i32) {
    %c0_i32 = arith.constant 0 : i32
    %c0_i32_0 = arith.constant 0 : i32
    %c0_i32_1 = arith.constant 0 : i32
    return %c0_i32, %c0_i32_0 : i32, i32
  }
  func.func @transform_4(%arg0: i32) -> (i32, i32) {
    %c0_i32 = arith.constant 0 : i32
    %c0_i32_0 = arith.constant 0 : i32
    %c0_i32_1 = arith.constant 0 : i32
    return %c0_i32, %c0_i32_0 : i32, i32
  }
  func.func @transform_5(%arg0: i32) -> (i32, i32) {
    %c0_i32 = arith.constant 0 : i32
    %c0_i32_0 = arith.constant 0 : i32
    %c0_i32_1 = arith.constant 0 : i32
    return %c0_i32, %c0_i32_0 : i32, i32
  }
  func.func @transform_6(%arg0: i32) -> i32 {
    %c0_i32 = arith.constant 0 : i32
    %c0_i32_0 = arith.constant 0 : i32
    return %c0_i32 : i32
  }
  func.func @transform_7(%arg0: i32) -> (i32, i32) {
    %c0_i32 = arith.constant 0 : i32
    %c0_i32_0 = arith.constant 0 : i32
    return %c0_i32, %arg0 : i32, i32
  }
}

</mosaic_0001>

<llo_original>
// kernel: apply.1
$region0: #{apply.1}
  #allocation0 [shape = 'u32[]', space=smem, size = 0x4, offset = 0x4, fixed_abs, tag = 'smem constant byte address 0x4 - core index']
  #allocation1 [shape = 'u32[144,128]{1,0:T(1,128)}', space=vmem, size = 0x12000, scoped, tag = 'internal scratch']
  #allocation2 [shape = 'f32[1]{0:T(128)S(6)}', space=smem, size = 0x200, scoped, tag = 'scoped memory for apply.1']
  %s0 = inlined_call_operand.hbm [shape: f32[8,5], index: 0, kind: input, shape index: {}]
  %s1 = inlined_call_operand.hbm [shape: bf16[64,5], index: 1, kind: input, shape index: {}]
  %s2 = inlined_call_operand.hbm [shape: f32[64,1], index: 2, kind: input, shape index: {}]
  %s3 = inlined_call_operand.vmem [shape: bf16[32,64], index: 3, kind: input, shape index: {}]
  %s4 = inlined_call_operand.hbm [shape: f32[32,1], index: 4, kind: input, shape index: {}]
  %s5 = inlined_call_operand.hbm [shape: f32[32,1], index: 5, kind: input, shape index: {}]
  %s6 = inlined_call_operand.<no memory space> [shape: f32[1], index: 6, kind: input, shape index: {}]
  %s7 = inlined_call_operand.vmem [shape: f32[1,128], index: 7, kind: output, shape index: {}]
  %s8 = sld [smem:[#allocation0]]
  $region58: #{apply.1} parent=0
    _
  %s10 = ssub.s32 1, %s8
  %s11 = scalar_select 0, %s10, %s8
  %12 = sst [smem:[#allocation2]] %s6
  $region1: #{apply.1} parent=0
    #allocation3 [shape = 'u8[65536]{0}', space=vmem, size = 0x10000, scoped, tag = 'input window, operand 0, single buffered']
    #allocation4 [shape = 's32[1]{0}', space=sflag, size = 0x4, scoped, tag = 'scoped memory for apply.1']
    #allocation5 [shape = 'u8[16384]{0}', space=vmem, size = 0x4000, scoped, tag = 'input window, operand 1, single buffered']
    #allocation6 [shape = 's32[1]{0}', space=sflag, size = 0x4, scoped, tag = 'scoped memory for apply.1']
    #allocation7 [shape = 'u8[32768]{0}', space=vmem, size = 0x8000, scoped, tag = 'input window, operand 2, single buffered']
    #allocation8 [shape = 'u8[16384]{0}', space=vmem, size = 0x4000, scoped, tag = 'input window, operand 4, single buffered']
    #allocation9 [shape = 's32[1]{0}', space=sflag, size = 0x4, scoped, tag = 'scoped memory for apply.1']
    #allocation10 [shape = 'u8[16384]{0}', space=vmem, size = 0x4000, scoped, tag = 'input window, operand 5, single buffered']
    %13 = vsyncpa [#allocation4], 0
    %14 = vsyncpa [#allocation6], 0
    %15 = vsyncpa [#allocation9], 0
    // Predicated region
    $region2: #{apply.1} parent=1 // pred_check
      _
    $region3: #{apply.1} parent=1 // pred_check_branch
      %17 = sbr.rel (0) target = $region5
    $region4: #{apply.1} parent=1 // pred_region
      %s19 = ssub.s32 2048, 128
      %20 = vsyncadd [#allocation4], %s19
      %s21 = sshll.u32 [#allocation3], 4
      %s22 = int_to_ptr.vmem [resolvable:$true] %s21
      %27 = dma.hbm_to_vmem [thread:$0]  %s0, 128, %s22, [#allocation4], 128, 128, 8
    $region5: #{apply.1} parent=1 // pred_fallthru
      _
    // Predicated region
    $region6: #{apply.1} parent=1 // pred_check
      _
    $region7: #{apply.1} parent=1 // pred_check_branch
      %29 = sbr.rel (0) target = $region9
    $region8: #{apply.1} parent=1 // pred_region
      %s31 = ssub.s32 512, 512
      %32 = vsyncadd [#allocation6], %s31
      %s33 = sshll.u32 [#allocation5], 4
      %s34 = int_to_ptr.vmem [resolvable:$true] %s33
      %39 = dma.hbm_to_vmem [thread:$0]  %s1, 512, %s34, [#allocation6], 64, 64, 4
    $region9: #{apply.1} parent=1 // pred_fallthru
      _
    // Predicated region
    $region10: #{apply.1} parent=1 // pred_check
      _
    $region11: #{apply.1} parent=1 // pred_check_branch
      %41 = sbr.rel (0) target = $region13
    $region12: #{apply.1} parent=1 // pred_region
      %s43 = ssub.s32 1024, 1024
      %44 = vsyncadd [#allocation6], %s43
      %s45 = sshll.u32 [#allocation7], 4
      %s46 = int_to_ptr.vmem [resolvable:$true] %s45
      %51 = dma.hbm_to_vmem [thread:$0]  %s2, 1024, %s46, [#allocation6], 128, 128, 8
    $region13: #{apply.1} parent=1 // pred_fallthru
      _
    // Predicated region
    $region14: #{apply.1} parent=1 // pred_check
      _
    $region15: #{apply.1} parent=1 // pred_check_branch
      %53 = sbr.rel (0) target = $region17
    $region16: #{apply.1} parent=1 // pred_region
      _
    $region17: #{apply.1} parent=1 // pred_fallthru
      _
    // Predicated region
    $region18: #{apply.1} parent=1 // pred_check
      _
    $region19: #{apply.1} parent=1 // pred_check_branch
      %55 = sbr.rel (0) target = $region21
    $region20: #{apply.1} parent=1 // pred_region
      %s57 = ssub.s32 512, 512
      %58 = vsyncadd [#allocation9], %s57
      %s59 = sshll.u32 [#allocation8], 4
      %s60 = int_to_ptr.vmem [resolvable:$true] %s59
      %65 = dma.hbm_to_vmem [thread:$0]  %s4, 512, %s60, [#allocation9], 128, 128, 8
    $region21: #{apply.1} parent=1 // pred_fallthru
      _
    // Predicated region
    $region22: #{apply.1} parent=1 // pred_check
      _
    $region23: #{apply.1} parent=1 // pred_check_branch
      %67 = sbr.rel (0) target = $region25
    $region24: #{apply.1} parent=1 // pred_region
      %s69 = ssub.s32 512, 512
      %70 = vsyncadd [#allocation9], %s69
      %s71 = sshll.u32 [#allocation10], 4
      %s72 = int_to_ptr.vmem [resolvable:$true] %s71
      %77 = dma.hbm_to_vmem [thread:$0]  %s5, 512, %s72, [#allocation9], 128, 128, 8
    $region25: #{apply.1} parent=1 // pred_fallthru
      _
    // Predicated region
    $region26: #{apply.1} parent=1 // pred_check
      _
    $region27: #{apply.1} parent=1 // pred_check_branch
      %79 = sbr.rel (0) target = $region29
    $region28: #{apply.1} parent=1 // pred_region
      _
    $region29: #{apply.1} parent=1 // pred_fallthru
      _
    // Predicated region
    $region30: #{apply.1} parent=1 // pred_check
      _
    $region31: #{apply.1} parent=1 // pred_check_branch
      %81 = sbr.rel (0) target = $region33
    $region32: #{apply.1} parent=1 // pred_region
      %82 = dma.done [#allocation4], 2048
    $region33: #{apply.1} parent=1 // pred_fallthru
      _
    // Predicated region
    $region34: #{apply.1} parent=1 // pred_check
      _
    $region35: #{apply.1} parent=1 // pred_check_branch
      %84 = sbr.rel (0) target = $region37
    $region36: #{apply.1} parent=1 // pred_region
      %85 = dma.done [#allocation6], 512
    $region37: #{apply.1} parent=1 // pred_fallthru
      _
    // Predicated region
    $region38: #{apply.1} parent=1 // pred_check
      _
    $region39: #{apply.1} parent=1 // pred_check_branch
      %87 = sbr.rel (0) target = $region41
    $region40: #{apply.1} parent=1 // pred_region
      %88 = dma.done [#allocation6], 1024
    $region41: #{apply.1} parent=1 // pred_fallthru
      _
    // Predicated region
    $region42: #{apply.1} parent=1 // pred_check
      _
    $region43: #{apply.1} parent=1 // pred_check_branch
      %90 = sbr.rel (0) target = $region45
    $region44: #{apply.1} parent=1 // pred_region
      %91 = dma.done [#allocation9], 512
    $region45: #{apply.1} parent=1 // pred_fallthru
      _
    // Predicated region
    $region46: #{apply.1} parent=1 // pred_check
      _
    $region47: #{apply.1} parent=1 // pred_check_branch
      %93 = sbr.rel (0) target = $region49
    $region48: #{apply.1} parent=1 // pred_region
      %94 = dma.done [#allocation9], 512
    $region49: #{apply.1} parent=1 // pred_fallthru
      _
    %v96 = vld [vmem:[#allocation3] sm:$0xff]
    %v97 = vld [vmem:[#allocation3 + $0x8] sm:$0xff]
    %v98 = vld [vmem:[#allocation3 + $0x10] sm:$0xff]
    %v99 = vld [vmem:[#allocation3 + $0x18] sm:$0xff]
    %v100 = vld [vmem:[#allocation3 + $0x20] sm:$0xff]
    %v101 = vld [vmem:[#allocation3 + $0x28] sm:$0xff]
    %v102 = vld [vmem:[#allocation3 + $0x30] sm:$0xff]
    %v103 = vld [vmem:[#allocation3 + $0x38] sm:$0xff]
    %v104 = vld [vmem:[#allocation3 + $0x40] sm:$0xff]
    %v105 = vld [vmem:[#allocation3 + $0x48] sm:$0xff]
    %v106 = vld [vmem:[#allocation3 + $0x50] sm:$0xff]
    %v107 = vld [vmem:[#allocation3 + $0x58] sm:$0xff]
    %v108 = vld [vmem:[#allocation3 + $0x60] sm:$0xff]
    %v109 = vld [vmem:[#allocation3 + $0x68] sm:$0xff]
    %v110 = vld [vmem:[#allocation3 + $0x70] sm:$0xff]
    %v111 = vld [vmem:[#allocation3 + $0x78] sm:$0xff]
    %v112 = vpack.c.bf16 %v97, %v96
    %v113 = vpack.c.bf16 %v99, %v98
    %v114 = vpack.c.bf16 %v101, %v100
    %v115 = vpack.c.bf16 %v103, %v102
    %v116 = vpack.c.bf16 %v105, %v104
    %v117 = vpack.c.bf16 %v107, %v106
    %v118 = vpack.c.bf16 %v109, %v108
    %v119 = vpack.c.bf16 %v111, %v110
    %v120 = vld [vmem:[#allocation5] sm:$0xf]
    %v121 = vld [vmem:[#allocation5 + $0x4] sm:$0xf]
    %v122 = vld [vmem:[#allocation5 + $0x8] sm:$0xf]
    %v123 = vld [vmem:[#allocation5 + $0xc] sm:$0xf]
    %v124 = vld [vmem:[#allocation5 + $0x10] sm:$0xf]
    %v125 = vld [vmem:[#allocation5 + $0x14] sm:$0xf]
    %v126 = vld [vmem:[#allocation5 + $0x18] sm:$0xf]
    %v127 = vld [vmem:[#allocation5 + $0x1c] sm:$0xf]
    %v128 = vld [vmem:[#allocation7] sm:$0xff]
    %v129 = vld [vmem:[#allocation7 + $0x8] sm:$0xff]
    %v130 = vld [vmem:[#allocation7 + $0x10] sm:$0xff]
    %v131 = vld [vmem:[#allocation7 + $0x18] sm:$0xff]
    %v132 = vld [vmem:[#allocation7 + $0x20] sm:$0xff]
    %v133 = vld [vmem:[#allocation7 + $0x28] sm:$0xff]
    %v134 = vld [vmem:[#allocation7 + $0x30] sm:$0xff]
    %v135 = vld [vmem:[#allocation7 + $0x38] sm:$0xff]
    %137 = vset.pattern.permute.xlu0 0
    %138 = vperm.xlu0 %137, %v128
    %v139 = vpop.permute.xlu0 %138
    %142 = vset.pattern.permute.xlu0 0
    %143 = vperm.xlu0 %142, %v129
    %v144 = vpop.permute.xlu0 %143
    %147 = vset.pattern.permute.xlu0 0
    %148 = vperm.xlu0 %147, %v130
    %v149 = vpop.permute.xlu0 %148
    %152 = vset.pattern.permute.xlu0 0
    %153 = vperm.xlu0 %152, %v131
    %v154 = vpop.permute.xlu0 %153
    %157 = vset.pattern.permute.xlu0 0
    %158 = vperm.xlu0 %157, %v132
    %v159 = vpop.permute.xlu0 %158
    %162 = vset.pattern.permute.xlu0 0
    %163 = vperm.xlu0 %162, %v133
    %v164 = vpop.permute.xlu0 %163
    %167 = vset.pattern.permute.xlu0 0
    %168 = vperm.xlu0 %167, %v134
    %v169 = vpop.permute.xlu0 %168
    %172 = vset.pattern.permute.xlu0 0
    %173 = vperm.xlu0 %172, %v135
    %v174 = vpop.permute.xlu0 %173
    %v184 = vunpack.c.l.b16 %v120
    %v185 = vunpack.c.l.b16 %v121
    %v186 = vunpack.c.l.b16 %v122
    %v187 = vunpack.c.l.b16 %v123
    %v188 = vunpack.c.l.b16 %v124
    %v189 = vunpack.c.l.b16 %v125
    %v190 = vunpack.c.l.b16 %v126
    %v191 = vunpack.c.l.b16 %v127
    %v192 = vpack.c.b16 %v185, %v184
    %v193 = vpack.c.b16 %v187, %v186
    %v194 = vpack.c.b16 %v189, %v188
    %v195 = vpack.c.b16 %v191, %v190
    %vm196 = vcmask 39936
    %v198 = vsel %vm196, %v192, 0
    %v201 = vsel %vm196, %v193, 0
    %v204 = vsel %vm196, %v194, 0
    %v207 = vsel %vm196, %v195, 0
    %v210 = vsel %vm196, %v112, 0
    %v213 = vsel %vm196, %v113, 0
    %v216 = vsel %vm196, %v114, 0
    %v219 = vsel %vm196, %v115, 0
    %v222 = vsel %vm196, %v116, 0
    %v225 = vsel %vm196, %v117, 0
    %v228 = vsel %vm196, %v118, 0
    %v231 = vsel %vm196, %v119, 0
    %233 = vmatprep.subr.bf16.mxu0 0
    %234 = vmatpush1.bf16.xpose.msra.mxu0 %v210
    %235 = vmatprep.subr.bf16.mxu0 0
    %236 = vmatpush1.bf16.xpose.msra.mxu0 %v213
    %237 = vmatprep.subr.bf16.mxu0 0
    %238 = vmatpush1.bf16.xpose.msra.mxu0 %v216
    %239 = vmatprep.subr.bf16.mxu0 0
    %240 = vmatpush1.bf16.xpose.msra.mxu0 %v219
    %241 = vmatprep.subr.bf16.mxu0 0
    %242 = vmatpush1.bf16.xpose.msra.mxu0 %v222
    %243 = vmatprep.subr.bf16.mxu0 0
    %244 = vmatpush1.bf16.xpose.msra.mxu0 %v225
    %245 = vmatprep.subr.bf16.mxu0 0
    %246 = vmatpush1.bf16.xpose.msra.mxu0 %v228
    %247 = vmatprep.subr.bf16.mxu0 0
    %248 = vmatpush1.bf16.xpose.msra.mxu0 %v231
    %249 = vmatprep.subr.bf16.mxu0 0
    %250 = vmatpush1.bf16.xpose.msra.mxu0 0
    %251 = vmatprep.subr.bf16.mxu0 0
    %252 = vmatpush1.bf16.xpose.msra.mxu0 0
    %253 = vmatprep.subr.bf16.mxu0 0
    %254 = vmatpush1.bf16.xpose.msra.mxu0 0
    %255 = vmatprep.subr.bf16.mxu0 0
    %256 = vmatpush1.bf16.xpose.msra.mxu0 0
    %257 = vmatprep.subr.bf16.mxu0 0
    %258 = vmatpush1.bf16.xpose.msra.mxu0 0
    %259 = vmatprep.subr.bf16.mxu0 0
    %260 = vmatpush1.bf16.xpose.msra.mxu0 0
    %261 = vmatprep.subr.bf16.mxu0 0
    %262 = vmatpush1.bf16.xpose.msra.mxu0 0
    %263 = vmatprep.subr.bf16.mxu0 0
    %264 = vmatpush1.bf16.xpose.msra.mxu0 0
    %265 = vmatprep.mubr.bf16.mxu0 0
    %266 = vmatmul.mubr.bf16.gmra.mrb[0].mxu0 %v198
    %v267 = vpop.f32.mrb[0].mxu0
    %v268 = vadd.f32 %v139, %v267
    %v269 = vpop.f32.mrb[0].mxu0
    %v270 = vpop.f32.mrb[0].mxu0
    %v271 = vadd.f32 %v144, %v270
    %v272 = vpop.f32.mrb[0].mxu0
    %273 = vmatprep.mubr.bf16.mxu0 0
    %274 = vmatmul.mubr.bf16.gmra.mrb[0].mxu0 %v201
    %v275 = vpop.f32.mrb[0].mxu0
    %v276 = vadd.f32 %v149, %v275
    %v277 = vpop.f32.mrb[0].mxu0
    %v278 = vpop.f32.mrb[0].mxu0
    %v279 = vadd.f32 %v154, %v278
    %v280 = vpop.f32.mrb[0].mxu0
    %281 = vmatprep.mubr.bf16.mxu0 0
    %282 = vmatmul.mubr.bf16.gmra.mrb[0].mxu0 %v204
    %v283 = vpop.f32.mrb[0].mxu0
    %v284 = vadd.f32 %v159, %v283
    %v285 = vpop.f32.mrb[0].mxu0
    %v286 = vpop.f32.mrb[0].mxu0
    %v287 = vadd.f32 %v164, %v286
    %v288 = vpop.f32.mrb[0].mxu0
    %289 = vmatprep.mubr.bf16.mxu0 0
    %290 = vmatmul.mubr.bf16.gmra.mrb[0].mxu0 %v207
    %v291 = vpop.f32.mrb[0].mxu0
    %v292 = vadd.f32 %v169, %v291
    %v293 = vpop.f32.mrb[0].mxu0
    %v294 = vpop.f32.mrb[0].mxu0
    %v295 = vadd.f32 %v174, %v294
    %v296 = vpop.f32.mrb[0].mxu0
    %297 = vdwg.mxu0
    %v298 = vmax.f32 %v268, 0.0
    %v299 = vmax.f32 %v271, 0.0
    %v300 = vmax.f32 %v276, 0.0
    %v301 = vmax.f32 %v279, 0.0
    %v302 = vmax.f32 %v284, 0.0
    %v303 = vmax.f32 %v287, 0.0
    %v304 = vmax.f32 %v292, 0.0
    %v305 = vmax.f32 %v295, 0.0
    %v306 = vld [vmem:[%s3] sm:$0xf]
    %v307 = vld [vmem:[%s3 + $0x4] sm:$0xf]
    %v308 = vld [vmem:[%s3 + $0x8] sm:$0xf]
    %v309 = vld [vmem:[%s3 + $0xc] sm:$0xf]
    %v310 = vpack.c.bf16 %v299, %v298
    %v311 = vpack.c.bf16 %v301, %v300
    %v312 = vpack.c.bf16 %v303, %v302
    %v313 = vpack.c.bf16 %v305, %v304
    %v314 = vld [vmem:[#allocation8] sm:$0xff]
    %v315 = vld [vmem:[#allocation8 + $0x8] sm:$0xff]
    %v316 = vld [vmem:[#allocation8 + $0x10] sm:$0xff]
    %v317 = vld [vmem:[#allocation8 + $0x18] sm:$0xff]
    %319 = vset.pattern.permute.xlu0 0
    %320 = vperm.xlu0 %319, %v314
    %v321 = vpop.permute.xlu0 %320
    %324 = vset.pattern.permute.xlu0 0
    %325 = vperm.xlu0 %324, %v315
    %v326 = vpop.permute.xlu0 %325
    %329 = vset.pattern.permute.xlu0 0
    %330 = vperm.xlu0 %329, %v316
    %v331 = vpop.permute.xlu0 %330
    %334 = vset.pattern.permute.xlu0 0
    %335 = vperm.xlu0 %334, %v317
    %v336 = vpop.permute.xlu0 %335
    %v342 = vunpack.c.l.b16 %v306
    %v343 = vunpack.c.l.b16 %v307
    %v344 = vunpack.c.l.b16 %v308
    %v345 = vunpack.c.l.b16 %v309
    %v346 = vpack.c.b16 %v343, %v342
    %v347 = vpack.c.b16 %v345, %v344
    %vm348 = vcmask 523264
    %v350 = vsel %vm348, %v346, 0
    %v353 = vsel %vm348, %v347, 0
    %355 = vmatprep.subr.bf16.mxu0 0
    %356 = vmatpush1.bf16.msra.mxu0 %v310
    %357 = vmatprep.subr.bf16.mxu0 0
    %358 = vmatpush1.bf16.msra.mxu0 %v311
    %359 = vmatprep.subr.bf16.mxu0 0
    %360 = vmatpush1.bf16.msra.mxu0 %v312
    %361 = vmatprep.subr.bf16.mxu0 0
    %362 = vmatpush1.bf16.msra.mxu0 %v313
    %363 = vmatprep.subr.bf16.mxu0 0
    %364 = vmatpush1.bf16.msra.mxu0 0
    %365 = vmatprep.subr.bf16.mxu0 0
    %366 = vmatpush1.bf16.msra.mxu0 0
    %367 = vmatprep.subr.bf16.mxu0 0
    %368 = vmatpush1.bf16.msra.mxu0 0
    %369 = vmatprep.subr.bf16.mxu0 0
    %370 = vmatpush1.bf16.msra.mxu0 0
    %371 = vmatprep.subr.bf16.mxu0 0
    %372 = vmatpush1.bf16.msra.mxu0 0
    %373 = vmatprep.subr.bf16.mxu0 0
    %374 = vmatpush1.bf16.msra.mxu0 0
    %375 = vmatprep.subr.bf16.mxu0 0
    %376 = vmatpush1.bf16.msra.mxu0 0
    %377 = vmatprep.subr.bf16.mxu0 0
    %378 = vmatpush1.bf16.msra.mxu0 0
    %379 = vmatprep.subr.bf16.mxu0 0
    %380 = vmatpush1.bf16.msra.mxu0 0
    %381 = vmatprep.subr.bf16.mxu0 0
    %382 = vmatpush1.bf16.msra.mxu0 0
    %383 = vmatprep.subr.bf16.mxu0 0
    %384 = vmatpush1.bf16.msra.mxu0 0
    %385 = vmatprep.subr.bf16.mxu0 0
    %386 = vmatpush1.bf16.msra.mxu0 0
    %387 = vmatprep.mubr.bf16.mxu0 0
    %388 = vmatmul.mubr.bf16.gmra.mrb[0].mxu0 %v350
    %v389 = vpop.f32.mrb[0].mxu0
    %v390 = vadd.f32 %v321, %v389
    %v391 = vpop.f32.mrb[0].mxu0
    %v392 = vpop.f32.mrb[0].mxu0
    %v393 = vadd.f32 %v326, %v392
    %v394 = vpop.f32.mrb[0].mxu0
    %395 = vmatprep.mubr.bf16.mxu0 0
    %396 = vmatmul.mubr.bf16.gmra.mrb[0].mxu0 %v353
    %v397 = vpop.f32.mrb[0].mxu0
    %v398 = vadd.f32 %v331, %v397
    %v399 = vpop.f32.mrb[0].mxu0
    %v400 = vpop.f32.mrb[0].mxu0
    %v401 = vadd.f32 %v336, %v400
    %v402 = vpop.f32.mrb[0].mxu0
    %403 = vdwg.mxu0
    %v404 = vmax.f32 %v390, 0.0
    %v405 = vmax.f32 %v393, 0.0
    %v406 = vmax.f32 %v398, 0.0
    %v407 = vmax.f32 %v401, 0.0
    %v408 = vld [vmem:[#allocation10] sm:$0xff]
    %v409 = vld [vmem:[#allocation10 + $0x8] sm:$0xff]
    %v410 = vld [vmem:[#allocation10 + $0x10] sm:$0xff]
    %v411 = vld [vmem:[#allocation10 + $0x18] sm:$0xff]
    %413 = vset.pattern.permute.xlu0 0
    %414 = vperm.xlu0 %413, %v408
    %v415 = vpop.permute.xlu0 %414
    %418 = vset.pattern.permute.xlu0 0
    %419 = vperm.xlu0 %418, %v409
    %v420 = vpop.permute.xlu0 %419
    %423 = vset.pattern.permute.xlu0 0
    %424 = vperm.xlu0 %423, %v410
    %v425 = vpop.permute.xlu0 %424
    %428 = vset.pattern.permute.xlu0 0
    %429 = vperm.xlu0 %428, %v411
    %v430 = vpop.permute.xlu0 %429
    %v432 = vmul.f32 %v404, %v415
    %v433 = vmul.f32 %v405, %v420
    %v434 = vmul.f32 %v406, %v425
    %v435 = vmul.f32 %v407, %v430
    %v436 = vadd.f32 %v432, %v433
    %v437 = vadd.f32 %v436, %v434
    %v438 = vadd.f32 %v437, %v435
    %v439 = vrot.slane %v438, 4
    %v440 = vadd.f32 %v438, %v439
    %v441 = vrot.slane %v440, 2
    %v442 = vadd.f32 %v440, %v441
    %v443 = vrot.slane %v442, 1
    %v444 = vadd.f32 %v442, %v443
    %s445 = sld [smem:[#allocation2]]
    %v446 = vstv %s445
    %v447 = vadd.f32 %v444, %v446
    %448 = vst [vmem:[%s7] sm:$0x1] %v447
    // Predicated region
    $region50: #{apply.1} parent=1 // pred_check
      _
    $region51: #{apply.1} parent=1 // pred_check_branch
      %450 = sbr.rel (0) target = $region53
    $region52: #{apply.1} parent=1 // pred_region
      _
    $region53: #{apply.1} parent=1 // pred_fallthru
      _
    // Predicated region
    $region54: #{apply.1} parent=1 // pred_check
      _
    $region55: #{apply.1} parent=1 // pred_check_branch
      %452 = sbr.rel (0) target = $region57
    $region56: #{apply.1} parent=1 // pred_region
      _
    $region57: #{apply.1} parent=1 // pred_fallthru
      _
    %453 = vsyncpa [#allocation4], 1
    %454 = vsyncpa [#allocation6], 1
    %455 = vsyncpa [#allocation9], 1

</llo_original>
